<compile_context>
chip_gen: v7x
topology: tpu7x:2x2x1
jax: 0.10.0
libtpu: 0.0.40
codegen_flags: <defaults>
</compile_context>

<pallas_src>
import functools

import jax
import jax.numpy as jnp
from jax.experimental import pallas as pl
from jax.experimental.pallas import tpu as pltpu

NUM_CLASSES = 4      # len(['EthanHouston','LegalEagle','PhilippeRemy','MichelleObama'])
IN_FEATURES = 512
LANE = 128           # class dim padded to one full lane width for the MXU / lane reductions
OUT_W = 8            # narrow f32 output slab; wrapper slices back to NUM_CLASSES
NEG_INF = -1e30      # bias for padding columns -> exp underflows to exactly 0 in the softmax


def _cdiv(a, b):
    return -(-a // b)


def _round_up(n, m):
    return _cdiv(n, m) * m


def _net_kernel(x_ref, w_ref, b_ref, o_ref):
    # x_ref: (TB, 512) f32   w_ref: (512, 128) bf16   b_ref: (1, 128) f32   o_ref: (TB, 8) f32
    xb = x_ref[...].astype(jnp.bfloat16)          # in-kernel cast: no extra HBM round trip
    logits = jnp.dot(xb, w_ref[...],
                     preferred_element_type=jnp.float32) + b_ref[...]
    # Numerically stable softmax along the class (lane) axis; padding columns carry a
    # -1e30 bias so they contribute exactly 0 to the denominator.
    m = jnp.max(logits, axis=1, keepdims=True)
    e = jnp.exp(logits - m)
    denom = jnp.sum(e, axis=1, keepdims=True)
    # Exact normalization; only the first OUT_W lanes are stored (narrow output slab).
    o_ref[...] = (e[:, :OUT_W] / denom).astype(o_ref.dtype)


@functools.partial(jax.jit, static_argnames=("block_b",))
def net_forward(x, w, b, *, block_b=2048):
    """softmax(x @ W + b, axis=1).  x: (B, 512) f32, w: (512, C) f32, b: (C,) f32 -> (B, C) f32."""
    B = x.shape[0]
    C = w.shape[1]

    # ---- one-time wrapper-side layout plumbing for the tiny parameters ----------------
    # Pad classes to 128 lanes: zero weight columns + -inf bias keeps the softmax exact.
    w_p = jnp.zeros((IN_FEATURES, LANE), jnp.bfloat16).at[:, :C].set(w.astype(jnp.bfloat16))
    b_p = jnp.full((1, LANE), NEG_INF, jnp.float32).at[:, :C].set(
        b.reshape(1, C).astype(jnp.float32))

    # Batch tile: multiple of 256 (covers 128-row v5e and 256-row v6e/v7x MXUs), never larger
    # than the (rounded) batch, and capped so the grid has >= 2 steps when B > 256 so the
    # "parallel" axis can shard across v7x's two TensorCores.  At tb=2048 the double-buffered
    # f32 x tile is ~8 MiB; 32 MiB scoped VMEM leaves headroom up to block_b=4096 on v5e.
    tb = _round_up(max(256, min(int(block_b), 4096)), 256)
    tb = min(tb, _round_up(B, 256))
    if B > 256:
        tb = min(tb, _round_up(_cdiv(B, 2), 256))
    grid_b = _cdiv(B, tb)   # partial last block handled by Pallas (no jnp.pad of x)

    out = pl.pallas_call(
        _net_kernel,
        out_shape=jax.ShapeDtypeStruct((B, OUT_W), jnp.float32),
        grid_spec=pltpu.PrefetchScalarGridSpec(
            num_scalar_prefetch=0,
            grid=(grid_b,),
            in_specs=[
                pl.BlockSpec((tb, IN_FEATURES), lambda i: (i, 0)),    # x: batch-tiled, f32
                pl.BlockSpec((IN_FEATURES, LANE), lambda i: (0, 0)),  # W: resident in VMEM
                pl.BlockSpec((1, LANE), lambda i: (0, 0)),            # bias: resident in VMEM
            ],
            out_specs=pl.BlockSpec((tb, OUT_W), lambda i: (i, 0)),    # narrow output slab
        ),
        compiler_params=pltpu.CompilerParams(
            dimension_semantics=("parallel",),        # independent batch tiles -> megacore
            vmem_limit_bytes=32 * 1024 * 1024,
        ),
    )(x.astype(jnp.float32), w_p, b_p)

    return out[:, :C]


if __name__ == "__main__":
    key = jax.random.PRNGKey(0)
    kx, kw, kb = jax.random.split(key, 3)

    B = 8
    # Deterministic parameter init (PyTorch nn.Linear-style uniform bound).
    bound = 1.0 / (IN_FEATURES ** 0.5)
    w = jax.random.uniform(kw, (IN_FEATURES, NUM_CLASSES), jnp.float32,
                           minval=-bound, maxval=bound)
    b = jax.random.uniform(kb, (NUM_CLASSES,), jnp.float32,
                           minval=-bound, maxval=bound)
    x = jax.random.normal(kx, (B, IN_FEATURES), jnp.float32)

    out = net_forward(x, w, b)
    jax.block_until_ready(out)

    # Reference with the same bf16 input precision and f32 accumulation.
    logits_ref = jnp.dot(x.astype(jnp.bfloat16), w.astype(jnp.bfloat16),
                         preferred_element_type=jnp.float32) + b
    ref = jax.nn.softmax(logits_ref, axis=1)
    ref_f32 = jax.nn.softmax(x @ w + b, axis=1)

    assert out.shape == (B, NUM_CLASSES)
    assert jnp.allclose(out, ref, atol=2e-3, rtol=2e-3), float(jnp.max(jnp.abs(out - ref)))
    assert jnp.allclose(out, ref_f32, atol=2e-2)          # loose check vs full-f32 math
    assert jnp.allclose(jnp.sum(out, axis=1), 1.0, atol=1e-5)

    print("KERNEL_OK")
</pallas_src>

<mosaic_0001>
module attributes {stable_mosaic.version = 11 : i64} {
  func.func @_net_kernel(%arg0: i32, %arg1: memref<256x512xf32, #tpu.memory_space<vmem>>, %arg2: memref<512x128xbf16, #tpu.memory_space<vmem>>, %arg3: memref<1x128xf32, #tpu.memory_space<vmem>>, %arg4: memref<256x8xf32, #tpu.memory_space<vmem>>) attributes {dimension_semantics = [#tpu.dimension_semantics<parallel>], iteration_bounds = array<i64: 1>, scalar_prefetch = 0 : i64, scratch_operands = 0 : i64, tpu.core_type = #tpu.core_type<tc>, window_params = [{transform_indices = @transform_0, window_bounds = array<i64: 256, 512>}, {pipeline_mode = #tpu.pipeline_mode<synchronous>, transform_indices = @transform_1, window_bounds = array<i64: 512, 128>}, {pipeline_mode = #tpu.pipeline_mode<synchronous>, transform_indices = @transform_2, window_bounds = array<i64: 1, 128>}, {transform_indices = @transform_3, window_bounds = array<i64: 256, 8>}]} {
    %c0 = arith.constant 0 : index
    %c0_0 = arith.constant 0 : index
    %0 = vector.load %arg1[%c0, %c0_0] : memref<256x512xf32, #tpu.memory_space<vmem>>, vector<256x512xf32>
    %1 = arith.truncf %0 : vector<256x512xf32> to vector<256x512xbf16>
    %c0_1 = arith.constant 0 : index
    %c0_2 = arith.constant 0 : index
    %2 = vector.load %arg2[%c0_1, %c0_2] : memref<512x128xbf16, #tpu.memory_space<vmem>>, vector<512x128xbf16>
    %cst = arith.constant dense<0.000000e+00> : vector<256x128xf32>
    %3 = tpu.matmul %1, %2, %cst {dimension_numbers = #tpu.dot_dimension_numbers<[1], [0], [0], [1], [0, 0, 1, 1], [], []>} : vector<256x512xbf16>, vector<512x128xbf16>, vector<256x128xf32> -> vector<256x128xf32>
    %c0_3 = arith.constant 0 : index
    %c0_4 = arith.constant 0 : index
    %4 = vector.load %arg3[%c0_3, %c0_4] : memref<1x128xf32, #tpu.memory_space<vmem>>, vector<1x128xf32>
    %5 = vector.broadcast %4 : vector<1x128xf32> to vector<256x128xf32>
    %6 = arith.addf %3, %5 : vector<256x128xf32>
    %cst_5 = arith.constant dense<0xFF800000> : vector<256xf32>
    %7 = vector.multi_reduction <maximumf>, %6, %cst_5 [1] : vector<256x128xf32> to vector<256xf32>
    %8 = vector.shape_cast %7 : vector<256xf32> to vector<256x1xf32>
    %9 = vector.broadcast %8 : vector<256x1xf32> to vector<256x128xf32>
    %10 = arith.subf %6, %9 : vector<256x128xf32>
    %11 = math.exp %10 : vector<256x128xf32>
    %cst_6 = arith.constant dense<0.000000e+00> : vector<256xf32>
    %12 = vector.multi_reduction <add>, %11, %cst_6 [1] : vector<256x128xf32> to vector<256xf32>
    %13 = vector.shape_cast %12 : vector<256xf32> to vector<256x1xf32>
    %14 = vector.extract_strided_slice %11 {offsets = [0, 0], sizes = [256, 8], strides = [1, 1]} : vector<256x128xf32> to vector<256x8xf32>
    %15 = vector.broadcast %13 : vector<256x1xf32> to vector<256x8xf32>
    %16 = arith.divf %14, %15 : vector<256x8xf32>
    %c0_7 = arith.constant 0 : index
    %c0_8 = arith.constant 0 : index
    %17 = vector.load %arg4[%c0_7, %c0_8] : memref<256x8xf32, #tpu.memory_space<vmem>>, vector<256x8xf32>
    tpu.vector_store %arg4[%c0_7, %c0_8], %16 {strides = array<i32>} : memref<256x8xf32, #tpu.memory_space<vmem>>, vector<256x8xf32>,
    return
  }
  func.func @transform_0(%arg0: i32) -> (i32, i32) {
    %c0_i32 = arith.constant 0 : i32
    %c0_i32_0 = arith.constant 0 : i32
    return %arg0, %c0_i32 : i32, i32
  }
  func.func @transform_1(%arg0: i32) -> (i32, i32) {
    %c0_i32 = arith.constant 0 : i32
    %c0_i32_0 = arith.constant 0 : i32
    %c0_i32_1 = arith.constant 0 : i32
    return %c0_i32, %c0_i32_0 : i32, i32
  }
  func.func @transform_2(%arg0: i32) -> (i32, i32) {
    %c0_i32 = arith.constant 0 : i32
    %c0_i32_0 = arith.constant 0 : i32
    %c0_i32_1 = arith.constant 0 : i32
    return %c0_i32, %c0_i32_0 : i32, i32
  }
  func.func @transform_3(%arg0: i32) -> (i32, i32) {
    %c0_i32 = arith.constant 0 : i32
    %c0_i32_0 = arith.constant 0 : i32
    return %arg0, %c0_i32 : i32, i32
  }
}

</mosaic_0001>

<llo_original>
// kernel: net_forward.1
$region0: #{net_forward.1}
  #allocation0 [shape = 'u32[]', space=smem, size = 0x4, offset = 0x4, fixed_abs, tag = 'smem constant byte address 0x4 - core index']
  #allocation1 [shape = 'u32[144,128]{1,0:T(1,128)}', space=vmem, size = 0x12000, scoped, tag = 'internal scratch']
  %s0 = inlined_call_operand.vmem [shape: f32[8,512], index: 0, kind: input, shape index: {}]
  %s1 = inlined_call_operand.vmem [shape: bf16[512,128], index: 1, kind: input, shape index: {}]
  %s2 = inlined_call_operand.vmem [shape: f32[1,128], index: 2, kind: input, shape index: {}]
  %s3 = inlined_call_operand.vmem [shape: f32[8,8], index: 3, kind: output, shape index: {}]
  %s4 = sld [smem:[#allocation0]]
  $region56: #{net_forward.1} parent=0
    _
  %s6 = ssub.s32 1, %s4
  %s7 = scalar_select 0, %s6, %s4
  $region1: #{net_forward.1} parent=0
    #allocation2 [shape = 'u8[131072]{0}', space=vmem, size = 0x20000, scoped, tag = 'output window, operand 0, single buffered']
    // Predicated region
    $region2: #{net_forward.1} parent=1 // pred_check
      _
    $region3: #{net_forward.1} parent=1 // pred_check_branch
      %9 = sbr.rel (0) target = $region5
    $region4: #{net_forward.1} parent=1 // pred_region
      _
    $region5: #{net_forward.1} parent=1 // pred_fallthru
      _
    // Predicated region
    $region6: #{net_forward.1} parent=1 // pred_check
      _
    $region7: #{net_forward.1} parent=1 // pred_check_branch
      %11 = sbr.rel (0) target = $region9
    $region8: #{net_forward.1} parent=1 // pred_region
      _
    $region9: #{net_forward.1} parent=1 // pred_fallthru
      _
    // Predicated region
    $region10: #{net_forward.1} parent=1 // pred_check
      _
    $region11: #{net_forward.1} parent=1 // pred_check_branch
      %13 = sbr.rel (0) target = $region13
    $region12: #{net_forward.1} parent=1 // pred_region
      _
    $region13: #{net_forward.1} parent=1 // pred_fallthru
      _
    %v15 = vld [vmem:[%s0] sm:$0xff]
    %v16 = vld [vmem:[%s0 + $0x8] sm:$0xff]
    %v17 = vld [vmem:[%s0 + $0x10] sm:$0xff]
    %v18 = vld [vmem:[%s0 + $0x18] sm:$0xff]
    %v19 = vld [vmem:[%s0 + $0x20] sm:$0xff]
    %v20 = vld [vmem:[%s0 + $0x28] sm:$0xff]
    %v21 = vld [vmem:[%s0 + $0x30] sm:$0xff]
    %v22 = vld [vmem:[%s0 + $0x38] sm:$0xff]
    %v23 = vld [vmem:[%s0 + $0x40] sm:$0xff]
    %v24 = vld [vmem:[%s0 + $0x48] sm:$0xff]
    %v25 = vld [vmem:[%s0 + $0x50] sm:$0xff]
    %v26 = vld [vmem:[%s0 + $0x58] sm:$0xff]
    %v27 = vld [vmem:[%s0 + $0x60] sm:$0xff]
    %v28 = vld [vmem:[%s0 + $0x68] sm:$0xff]
    %v29 = vld [vmem:[%s0 + $0x70] sm:$0xff]
    %v30 = vld [vmem:[%s0 + $0x78] sm:$0xff]
    %v31 = vld [vmem:[%s0 + $0x80] sm:$0xff]
    %v32 = vld [vmem:[%s0 + $0x88] sm:$0xff]
    %v33 = vld [vmem:[%s0 + $0x90] sm:$0xff]
    %v34 = vld [vmem:[%s0 + $0x98] sm:$0xff]
    %v35 = vld [vmem:[%s0 + $0xa0] sm:$0xff]
    %v36 = vld [vmem:[%s0 + $0xa8] sm:$0xff]
    %v37 = vld [vmem:[%s0 + $0xb0] sm:$0xff]
    %v38 = vld [vmem:[%s0 + $0xb8] sm:$0xff]
    %v39 = vld [vmem:[%s0 + $0xc0] sm:$0xff]
    %v40 = vld [vmem:[%s0 + $0xc8] sm:$0xff]
    %v41 = vld [vmem:[%s0 + $0xd0] sm:$0xff]
    %v42 = vld [vmem:[%s0 + $0xd8] sm:$0xff]
    %v43 = vld [vmem:[%s0 + $0xe0] sm:$0xff]
    %v44 = vld [vmem:[%s0 + $0xe8] sm:$0xff]
    %v45 = vld [vmem:[%s0 + $0xf0] sm:$0xff]
    %v46 = vld [vmem:[%s0 + $0xf8] sm:$0xff]
    %v47 = vld [vmem:[%s0 + $0x100] sm:$0xff]
    %v48 = vld [vmem:[%s0 + $0x108] sm:$0xff]
    %v49 = vld [vmem:[%s0 + $0x110] sm:$0xff]
    %v50 = vld [vmem:[%s0 + $0x118] sm:$0xff]
    %v51 = vld [vmem:[%s0 + $0x120] sm:$0xff]
    %v52 = vld [vmem:[%s0 + $0x128] sm:$0xff]
    %v53 = vld [vmem:[%s0 + $0x130] sm:$0xff]
    %v54 = vld [vmem:[%s0 + $0x138] sm:$0xff]
    %v55 = vld [vmem:[%s0 + $0x140] sm:$0xff]
    %v56 = vld [vmem:[%s0 + $0x148] sm:$0xff]
    %v57 = vld [vmem:[%s0 + $0x150] sm:$0xff]
    %v58 = vld [vmem:[%s0 + $0x158] sm:$0xff]
    %v59 = vld [vmem:[%s0 + $0x160] sm:$0xff]
    %v60 = vld [vmem:[%s0 + $0x168] sm:$0xff]
    %v61 = vld [vmem:[%s0 + $0x170] sm:$0xff]
    %v62 = vld [vmem:[%s0 + $0x178] sm:$0xff]
    %v63 = vld [vmem:[%s0 + $0x180] sm:$0xff]
    %v64 = vld [vmem:[%s0 + $0x188] sm:$0xff]
    %v65 = vld [vmem:[%s0 + $0x190] sm:$0xff]
    %v66 = vld [vmem:[%s0 + $0x198] sm:$0xff]
    %v67 = vld [vmem:[%s0 + $0x1a0] sm:$0xff]
    %v68 = vld [vmem:[%s0 + $0x1a8] sm:$0xff]
    %v69 = vld [vmem:[%s0 + $0x1b0] sm:$0xff]
    %v70 = vld [vmem:[%s0 + $0x1b8] sm:$0xff]
    %v71 = vld [vmem:[%s0 + $0x1c0] sm:$0xff]
    %v72 = vld [vmem:[%s0 + $0x1c8] sm:$0xff]
    %v73 = vld [vmem:[%s0 + $0x1d0] sm:$0xff]
    %v74 = vld [vmem:[%s0 + $0x1d8] sm:$0xff]
    %v75 = vld [vmem:[%s0 + $0x1e0] sm:$0xff]
    %v76 = vld [vmem:[%s0 + $0x1e8] sm:$0xff]
    %v77 = vld [vmem:[%s0 + $0x1f0] sm:$0xff]
    %v78 = vld [vmem:[%s0 + $0x1f8] sm:$0xff]
    %v79 = vld [vmem:[%s0 + $0x200] sm:$0xff]
    %v80 = vld [vmem:[%s0 + $0x208] sm:$0xff]
    %v81 = vld [vmem:[%s0 + $0x210] sm:$0xff]
    %v82 = vld [vmem:[%s0 + $0x218] sm:$0xff]
    %v83 = vld [vmem:[%s0 + $0x220] sm:$0xff]
    %v84 = vld [vmem:[%s0 + $0x228] sm:$0xff]
    %v85 = vld [vmem:[%s0 + $0x230] sm:$0xff]
    %v86 = vld [vmem:[%s0 + $0x238] sm:$0xff]
    %v87 = vld [vmem:[%s0 + $0x240] sm:$0xff]
    %v88 = vld [vmem:[%s0 + $0x248] sm:$0xff]
    %v89 = vld [vmem:[%s0 + $0x250] sm:$0xff]
    %v90 = vld [vmem:[%s0 + $0x258] sm:$0xff]
    %v91 = vld [vmem:[%s0 + $0x260] sm:$0xff]
    %v92 = vld [vmem:[%s0 + $0x268] sm:$0xff]
    %v93 = vld [vmem:[%s0 + $0x270] sm:$0xff]
    %v94 = vld [vmem:[%s0 + $0x278] sm:$0xff]
    %v95 = vld [vmem:[%s0 + $0x280] sm:$0xff]
    %v96 = vld [vmem:[%s0 + $0x288] sm:$0xff]
    %v97 = vld [vmem:[%s0 + $0x290] sm:$0xff]
    %v98 = vld [vmem:[%s0 + $0x298] sm:$0xff]
    %v99 = vld [vmem:[%s0 + $0x2a0] sm:$0xff]
    %v100 = vld [vmem:[%s0 + $0x2a8] sm:$0xff]
    %v101 = vld [vmem:[%s0 + $0x2b0] sm:$0xff]
    %v102 = vld [vmem:[%s0 + $0x2b8] sm:$0xff]
    %v103 = vld [vmem:[%s0 + $0x2c0] sm:$0xff]
    %v104 = vld [vmem:[%s0 + $0x2c8] sm:$0xff]
    %v105 = vld [vmem:[%s0 + $0x2d0] sm:$0xff]
    %v106 = vld [vmem:[%s0 + $0x2d8] sm:$0xff]
    %v107 = vld [vmem:[%s0 + $0x2e0] sm:$0xff]
    %v108 = vld [vmem:[%s0 + $0x2e8] sm:$0xff]
    %v109 = vld [vmem:[%s0 + $0x2f0] sm:$0xff]
    %v110 = vld [vmem:[%s0 + $0x2f8] sm:$0xff]
    %v111 = vld [vmem:[%s0 + $0x300] sm:$0xff]
    %v112 = vld [vmem:[%s0 + $0x308] sm:$0xff]
    %v113 = vld [vmem:[%s0 + $0x310] sm:$0xff]
    %v114 = vld [vmem:[%s0 + $0x318] sm:$0xff]
    %v115 = vld [vmem:[%s0 + $0x320] sm:$0xff]
    %v116 = vld [vmem:[%s0 + $0x328] sm:$0xff]
    %v117 = vld [vmem:[%s0 + $0x330] sm:$0xff]
    %v118 = vld [vmem:[%s0 + $0x338] sm:$0xff]
    %v119 = vld [vmem:[%s0 + $0x340] sm:$0xff]
    %v120 = vld [vmem:[%s0 + $0x348] sm:$0xff]
    %v121 = vld [vmem:[%s0 + $0x350] sm:$0xff]
    %v122 = vld [vmem:[%s0 + $0x358] sm:$0xff]
    %v123 = vld [vmem:[%s0 + $0x360] sm:$0xff]
    %v124 = vld [vmem:[%s0 + $0x368] sm:$0xff]
    %v125 = vld [vmem:[%s0 + $0x370] sm:$0xff]
    %v126 = vld [vmem:[%s0 + $0x378] sm:$0xff]
    %v127 = vld [vmem:[%s0 + $0x380] sm:$0xff]
    %v128 = vld [vmem:[%s0 + $0x388] sm:$0xff]
    %v129 = vld [vmem:[%s0 + $0x390] sm:$0xff]
    %v130 = vld [vmem:[%s0 + $0x398] sm:$0xff]
    %v131 = vld [vmem:[%s0 + $0x3a0] sm:$0xff]
    %v132 = vld [vmem:[%s0 + $0x3a8] sm:$0xff]
    %v133 = vld [vmem:[%s0 + $0x3b0] sm:$0xff]
    %v134 = vld [vmem:[%s0 + $0x3b8] sm:$0xff]
    %v135 = vld [vmem:[%s0 + $0x3c0] sm:$0xff]
    %v136 = vld [vmem:[%s0 + $0x3c8] sm:$0xff]
    %v137 = vld [vmem:[%s0 + $0x3d0] sm:$0xff]
    %v138 = vld [vmem:[%s0 + $0x3d8] sm:$0xff]
    %v139 = vld [vmem:[%s0 + $0x3e0] sm:$0xff]
    %v140 = vld [vmem:[%s0 + $0x3e8] sm:$0xff]
    %v141 = vld [vmem:[%s0 + $0x3f0] sm:$0xff]
    %v142 = vld [vmem:[%s0 + $0x3f8] sm:$0xff]
    %v143 = vpack.c.bf16 %v19, %v15
    %v144 = vpack.c.bf16 %v20, %v16
    %v145 = vpack.c.bf16 %v21, %v17
    %v146 = vpack.c.bf16 %v22, %v18
    %v147 = vpack.c.bf16 %v27, %v23
    %v148 = vpack.c.bf16 %v28, %v24
    %v149 = vpack.c.bf16 %v29, %v25
    %v150 = vpack.c.bf16 %v30, %v26
    %v151 = vpack.c.bf16 %v35, %v31
    %v152 = vpack.c.bf16 %v36, %v32
    %v153 = vpack.c.bf16 %v37, %v33
    %v154 = vpack.c.bf16 %v38, %v34
    %v155 = vpack.c.bf16 %v43, %v39
    %v156 = vpack.c.bf16 %v44, %v40
    %v157 = vpack.c.bf16 %v45, %v41
    %v158 = vpack.c.bf16 %v46, %v42
    %v159 = vpack.c.bf16 %v51, %v47
    %v160 = vpack.c.bf16 %v52, %v48
    %v161 = vpack.c.bf16 %v53, %v49
    %v162 = vpack.c.bf16 %v54, %v50
    %v163 = vpack.c.bf16 %v59, %v55
    %v164 = vpack.c.bf16 %v60, %v56
    %v165 = vpack.c.bf16 %v61, %v57
    %v166 = vpack.c.bf16 %v62, %v58
    %v167 = vpack.c.bf16 %v67, %v63
    %v168 = vpack.c.bf16 %v68, %v64
    %v169 = vpack.c.bf16 %v69, %v65
    %v170 = vpack.c.bf16 %v70, %v66
    %v171 = vpack.c.bf16 %v75, %v71
    %v172 = vpack.c.bf16 %v76, %v72
    %v173 = vpack.c.bf16 %v77, %v73
    %v174 = vpack.c.bf16 %v78, %v74
    %v175 = vpack.c.bf16 %v83, %v79
    %v176 = vpack.c.bf16 %v84, %v80
    %v177 = vpack.c.bf16 %v85, %v81
    %v178 = vpack.c.bf16 %v86, %v82
    %v179 = vpack.c.bf16 %v91, %v87
    %v180 = vpack.c.bf16 %v92, %v88
    %v181 = vpack.c.bf16 %v93, %v89
    %v182 = vpack.c.bf16 %v94, %v90
    %v183 = vpack.c.bf16 %v99, %v95
    %v184 = vpack.c.bf16 %v100, %v96
    %v185 = vpack.c.bf16 %v101, %v97
    %v186 = vpack.c.bf16 %v102, %v98
    %v187 = vpack.c.bf16 %v107, %v103
    %v188 = vpack.c.bf16 %v108, %v104
    %v189 = vpack.c.bf16 %v109, %v105
    %v190 = vpack.c.bf16 %v110, %v106
    %v191 = vpack.c.bf16 %v115, %v111
    %v192 = vpack.c.bf16 %v116, %v112
    %v193 = vpack.c.bf16 %v117, %v113
    %v194 = vpack.c.bf16 %v118, %v114
    %v195 = vpack.c.bf16 %v123, %v119
    %v196 = vpack.c.bf16 %v124, %v120
    %v197 = vpack.c.bf16 %v125, %v121
    %v198 = vpack.c.bf16 %v126, %v122
    %v199 = vpack.c.bf16 %v131, %v127
    %v200 = vpack.c.bf16 %v132, %v128
    %v201 = vpack.c.bf16 %v133, %v129
    %v202 = vpack.c.bf16 %v134, %v130
    %v203 = vpack.c.bf16 %v139, %v135
    %v204 = vpack.c.bf16 %v140, %v136
    %v205 = vpack.c.bf16 %v141, %v137
    %v206 = vpack.c.bf16 %v142, %v138
    %v207 = vld [vmem:[%s1] sm:$0xf]
    %v208 = vld [vmem:[%s1 + $0x4] sm:$0xf]
    %v209 = vld [vmem:[%s1 + $0x8] sm:$0xf]
    %v210 = vld [vmem:[%s1 + $0xc] sm:$0xf]
    %v211 = vld [vmem:[%s1 + $0x10] sm:$0xf]
    %v212 = vld [vmem:[%s1 + $0x14] sm:$0xf]
    %v213 = vld [vmem:[%s1 + $0x18] sm:$0xf]
    %v214 = vld [vmem:[%s1 + $0x1c] sm:$0xf]
    %v215 = vld [vmem:[%s1 + $0x20] sm:$0xf]
    %v216 = vld [vmem:[%s1 + $0x24] sm:$0xf]
    %v217 = vld [vmem:[%s1 + $0x28] sm:$0xf]
    %v218 = vld [vmem:[%s1 + $0x2c] sm:$0xf]
    %v219 = vld [vmem:[%s1 + $0x30] sm:$0xf]
    %v220 = vld [vmem:[%s1 + $0x34] sm:$0xf]
    %v221 = vld [vmem:[%s1 + $0x38] sm:$0xf]
    %v222 = vld [vmem:[%s1 + $0x3c] sm:$0xf]
    %v223 = vld [vmem:[%s1 + $0x40] sm:$0xf]
    %v224 = vld [vmem:[%s1 + $0x44] sm:$0xf]
    %v225 = vld [vmem:[%s1 + $0x48] sm:$0xf]
    %v226 = vld [vmem:[%s1 + $0x4c] sm:$0xf]
    %v227 = vld [vmem:[%s1 + $0x50] sm:$0xf]
    %v228 = vld [vmem:[%s1 + $0x54] sm:$0xf]
    %v229 = vld [vmem:[%s1 + $0x58] sm:$0xf]
    %v230 = vld [vmem:[%s1 + $0x5c] sm:$0xf]
    %v231 = vld [vmem:[%s1 + $0x60] sm:$0xf]
    %v232 = vld [vmem:[%s1 + $0x64] sm:$0xf]
    %v233 = vld [vmem:[%s1 + $0x68] sm:$0xf]
    %v234 = vld [vmem:[%s1 + $0x6c] sm:$0xf]
    %v235 = vld [vmem:[%s1 + $0x70] sm:$0xf]
    %v236 = vld [vmem:[%s1 + $0x74] sm:$0xf]
    %v237 = vld [vmem:[%s1 + $0x78] sm:$0xf]
    %v238 = vld [vmem:[%s1 + $0x7c] sm:$0xf]
    %v239 = vld [vmem:[%s1 + $0x80] sm:$0xf]
    %v240 = vld [vmem:[%s1 + $0x84] sm:$0xf]
    %v241 = vld [vmem:[%s1 + $0x88] sm:$0xf]
    %v242 = vld [vmem:[%s1 + $0x8c] sm:$0xf]
    %v243 = vld [vmem:[%s1 + $0x90] sm:$0xf]
    %v244 = vld [vmem:[%s1 + $0x94] sm:$0xf]
    %v245 = vld [vmem:[%s1 + $0x98] sm:$0xf]
    %v246 = vld [vmem:[%s1 + $0x9c] sm:$0xf]
    %v247 = vld [vmem:[%s1 + $0xa0] sm:$0xf]
    %v248 = vld [vmem:[%s1 + $0xa4] sm:$0xf]
    %v249 = vld [vmem:[%s1 + $0xa8] sm:$0xf]
    %v250 = vld [vmem:[%s1 + $0xac] sm:$0xf]
    %v251 = vld [vmem:[%s1 + $0xb0] sm:$0xf]
    %v252 = vld [vmem:[%s1 + $0xb4] sm:$0xf]
    %v253 = vld [vmem:[%s1 + $0xb8] sm:$0xf]
    %v254 = vld [vmem:[%s1 + $0xbc] sm:$0xf]
    %v255 = vld [vmem:[%s1 + $0xc0] sm:$0xf]
    %v256 = vld [vmem:[%s1 + $0xc4] sm:$0xf]
    %v257 = vld [vmem:[%s1 + $0xc8] sm:$0xf]
    %v258 = vld [vmem:[%s1 + $0xcc] sm:$0xf]
    %v259 = vld [vmem:[%s1 + $0xd0] sm:$0xf]
    %v260 = vld [vmem:[%s1 + $0xd4] sm:$0xf]
    %v261 = vld [vmem:[%s1 + $0xd8] sm:$0xf]
    %v262 = vld [vmem:[%s1 + $0xdc] sm:$0xf]
    %v263 = vld [vmem:[%s1 + $0xe0] sm:$0xf]
    %v264 = vld [vmem:[%s1 + $0xe4] sm:$0xf]
    %v265 = vld [vmem:[%s1 + $0xe8] sm:$0xf]
    %v266 = vld [vmem:[%s1 + $0xec] sm:$0xf]
    %v267 = vld [vmem:[%s1 + $0xf0] sm:$0xf]
    %v268 = vld [vmem:[%s1 + $0xf4] sm:$0xf]
    %v269 = vld [vmem:[%s1 + $0xf8] sm:$0xf]
    %v270 = vld [vmem:[%s1 + $0xfc] sm:$0xf]
    %v271 = vld [vmem:[%s2] sm:$0x1]
    %v273 = vlaneseq
    %v274 = vshrl.u32 %v273, 7
    %v275 = vsub.s32 0, %v274
    %v276 = vrot.slane %v271, %v275
    %v342 = vunpack.c.l.b16 %v207
    %v343 = vunpack.c.l.b16 %v208
    %v344 = vunpack.c.l.b16 %v209
    %v345 = vunpack.c.l.b16 %v210
    %v346 = vunpack.c.l.b16 %v211
    %v347 = vunpack.c.l.b16 %v212
    %v348 = vunpack.c.l.b16 %v213
    %v349 = vunpack.c.l.b16 %v214
    %v350 = vunpack.c.l.b16 %v215
    %v351 = vunpack.c.l.b16 %v216
    %v352 = vunpack.c.l.b16 %v217
    %v353 = vunpack.c.l.b16 %v218
    %v354 = vunpack.c.l.b16 %v219
    %v355 = vunpack.c.l.b16 %v220
    %v356 = vunpack.c.l.b16 %v221
    %v357 = vunpack.c.l.b16 %v222
    %v358 = vunpack.c.l.b16 %v223
    %v359 = vunpack.c.l.b16 %v224
    %v360 = vunpack.c.l.b16 %v225
    %v361 = vunpack.c.l.b16 %v226
    %v362 = vunpack.c.l.b16 %v227
    %v363 = vunpack.c.l.b16 %v228
    %v364 = vunpack.c.l.b16 %v229
    %v365 = vunpack.c.l.b16 %v230
    %v366 = vunpack.c.l.b16 %v231
    %v367 = vunpack.c.l.b16 %v232
    %v368 = vunpack.c.l.b16 %v233
    %v369 = vunpack.c.l.b16 %v234
    %v370 = vunpack.c.l.b16 %v235
    %v371 = vunpack.c.l.b16 %v236
    %v372 = vunpack.c.l.b16 %v237
    %v373 = vunpack.c.l.b16 %v238
    %v374 = vunpack.c.l.b16 %v239
    %v375 = vunpack.c.l.b16 %v240
    %v376 = vunpack.c.l.b16 %v241
    %v377 = vunpack.c.l.b16 %v242
    %v378 = vunpack.c.l.b16 %v243
    %v379 = vunpack.c.l.b16 %v244
    %v380 = vunpack.c.l.b16 %v245
    %v381 = vunpack.c.l.b16 %v246
    %v382 = vunpack.c.l.b16 %v247
    %v383 = vunpack.c.l.b16 %v248
    %v384 = vunpack.c.l.b16 %v249
    %v385 = vunpack.c.l.b16 %v250
    %v386 = vunpack.c.l.b16 %v251
    %v387 = vunpack.c.l.b16 %v252
    %v388 = vunpack.c.l.b16 %v253
    %v389 = vunpack.c.l.b16 %v254
    %v390 = vunpack.c.l.b16 %v255
    %v391 = vunpack.c.l.b16 %v256
    %v392 = vunpack.c.l.b16 %v257
    %v393 = vunpack.c.l.b16 %v258
    %v394 = vunpack.c.l.b16 %v259
    %v395 = vunpack.c.l.b16 %v260
    %v396 = vunpack.c.l.b16 %v261
    %v397 = vunpack.c.l.b16 %v262
    %v398 = vunpack.c.l.b16 %v263
    %v399 = vunpack.c.l.b16 %v264
    %v400 = vunpack.c.l.b16 %v265
    %v401 = vunpack.c.l.b16 %v266
    %v402 = vunpack.c.l.b16 %v267
    %v403 = vunpack.c.l.b16 %v268
    %v404 = vunpack.c.l.b16 %v269
    %v405 = vunpack.c.l.b16 %v270
    %v406 = vpack.c.b16 %v343, %v342
    %v407 = vpack.c.b16 %v345, %v344
    %v408 = vpack.c.b16 %v347, %v346
    %v409 = vpack.c.b16 %v349, %v348
    %v410 = vpack.c.b16 %v351, %v350
    %v411 = vpack.c.b16 %v353, %v352
    %v412 = vpack.c.b16 %v355, %v354
    %v413 = vpack.c.b16 %v357, %v356
    %v414 = vpack.c.b16 %v359, %v358
    %v415 = vpack.c.b16 %v361, %v360
    %v416 = vpack.c.b16 %v363, %v362
    %v417 = vpack.c.b16 %v365, %v364
    %v418 = vpack.c.b16 %v367, %v366
    %v419 = vpack.c.b16 %v369, %v368
    %v420 = vpack.c.b16 %v371, %v370
    %v421 = vpack.c.b16 %v373, %v372
    %v422 = vpack.c.b16 %v375, %v374
    %v423 = vpack.c.b16 %v377, %v376
    %v424 = vpack.c.b16 %v379, %v378
    %v425 = vpack.c.b16 %v381, %v380
    %v426 = vpack.c.b16 %v383, %v382
    %v427 = vpack.c.b16 %v385, %v384
    %v428 = vpack.c.b16 %v387, %v386
    %v429 = vpack.c.b16 %v389, %v388
    %v430 = vpack.c.b16 %v391, %v390
    %v431 = vpack.c.b16 %v393, %v392
    %v432 = vpack.c.b16 %v395, %v394
    %v433 = vpack.c.b16 %v397, %v396
    %v434 = vpack.c.b16 %v399, %v398
    %v435 = vpack.c.b16 %v401, %v400
    %v436 = vpack.c.b16 %v403, %v402
    %v437 = vpack.c.b16 %v405, %v404
    %470 = vmatprep.subr.bf16.mxu0 0
    %471 = vmatpush1.bf16.msra.mxu0 %v406
    %472 = vmatprep.subr.bf16.mxu0 0
    %473 = vmatpush1.bf16.msra.mxu0 %v407
    %474 = vmatprep.subr.bf16.mxu0 0
    %475 = vmatpush1.bf16.msra.mxu0 %v408
    %476 = vmatprep.subr.bf16.mxu0 0
    %477 = vmatpush1.bf16.msra.mxu0 %v409
    %478 = vmatprep.subr.bf16.mxu0 0
    %479 = vmatpush1.bf16.msra.mxu0 %v410
    %480 = vmatprep.subr.bf16.mxu0 0
    %481 = vmatpush1.bf16.msra.mxu0 %v411
    %482 = vmatprep.subr.bf16.mxu0 0
    %483 = vmatpush1.bf16.msra.mxu0 %v412
    %484 = vmatprep.subr.bf16.mxu0 0
    %485 = vmatpush1.bf16.msra.mxu0 %v413
    %486 = vmatprep.subr.bf16.mxu0 0
    %487 = vmatpush1.bf16.msra.mxu0 %v414
    %488 = vmatprep.subr.bf16.mxu0 0
    %489 = vmatpush1.bf16.msra.mxu0 %v415
    %490 = vmatprep.subr.bf16.mxu0 0
    %491 = vmatpush1.bf16.msra.mxu0 %v416
    %492 = vmatprep.subr.bf16.mxu0 0
    %493 = vmatpush1.bf16.msra.mxu0 %v417
    %494 = vmatprep.subr.bf16.mxu0 0
    %495 = vmatpush1.bf16.msra.mxu0 %v418
    %496 = vmatprep.subr.bf16.mxu0 0
    %497 = vmatpush1.bf16.msra.mxu0 %v419
    %498 = vmatprep.subr.bf16.mxu0 0
    %499 = vmatpush1.bf16.msra.mxu0 %v420
    %500 = vmatprep.subr.bf16.mxu0 0
    %501 = vmatpush1.bf16.msra.mxu0 %v421
    %502 = vmatprep.mubr.bf16.mxu0 %v144
    %503 = vmatmul.mubr.bf16.gmra.mrb[0].mxu0 %v143
    %v504 = vpop.f32.mrb[0].mxu0
    %v505 = vadd.f32 %v276, %v504
    %v506 = vpop.f32.mrb[0].mxu0
    %v507 = vpop.f32.mrb[0].mxu0
    %v508 = vadd.f32 %v276, %v507
    %v509 = vpop.f32.mrb[0].mxu0
    %510 = vmatprep.mubr.bf16.mxu0 %v148
    %511 = vmatmul.mubr.bf16.gmra.mrb[0].mxu0 %v147
    %v512 = vpop.f32.mrb[0].mxu0
    %v513 = vadd.f32 %v276, %v512
    %v514 = vpop.f32.mrb[0].mxu0
    %v515 = vpop.f32.mrb[0].mxu0
    %v516 = vadd.f32 %v276, %v515
    %v517 = vpop.f32.mrb[0].mxu0
    %518 = vmatprep.mubr.bf16.mxu0 %v152
    %519 = vmatmul.mubr.bf16.gmra.mrb[0].mxu0 %v151
    %v520 = vpop.f32.mrb[0].mxu0
    %v521 = vadd.f32 %v276, %v520
    %v522 = vpop.f32.mrb[0].mxu0
    %v523 = vpop.f32.mrb[0].mxu0
    %v524 = vadd.f32 %v276, %v523
    %v525 = vpop.f32.mrb[0].mxu0
    %526 = vmatprep.mubr.bf16.mxu0 %v156
    %527 = vmatmul.mubr.bf16.gmra.mrb[0].mxu0 %v155
    %v528 = vpop.f32.mrb[0].mxu0
    %v529 = vadd.f32 %v276, %v528
    %v530 = vpop.f32.mrb[0].mxu0
    %v531 = vpop.f32.mrb[0].mxu0
    %v532 = vadd.f32 %v276, %v531
    %v533 = vpop.f32.mrb[0].mxu0
    %534 = vmatprep.mubr.bf16.mxu0 %v160
    %535 = vmatmul.mubr.bf16.gmra.mrb[0].mxu0 %v159
    %v536 = vpop.f32.mrb[0].mxu0
    %v537 = vadd.f32 %v276, %v536
    %v538 = vpop.f32.mrb[0].mxu0
    %v539 = vpop.f32.mrb[0].mxu0
    %v540 = vadd.f32 %v276, %v539
    %v541 = vpop.f32.mrb[0].mxu0
    %542 = vmatprep.mubr.bf16.mxu0 %v164
    %543 = vmatmul.mubr.bf16.gmra.mrb[0].mxu0 %v163
    %v544 = vpop.f32.mrb[0].mxu0
    %v545 = vadd.f32 %v276, %v544
    %v546 = vpop.f32.mrb[0].mxu0
    %v547 = vpop.f32.mrb[0].mxu0
    %v548 = vadd.f32 %v276, %v547
    %v549 = vpop.f32.mrb[0].mxu0
    %550 = vmatprep.mubr.bf16.mxu0 %v168
    %551 = vmatmul.mubr.bf16.gmra.mrb[0].mxu0 %v167
    %v552 = vpop.f32.mrb[0].mxu0
    %v553 = vadd.f32 %v276, %v552
    %v554 = vpop.f32.mrb[0].mxu0
    %v555 = vpop.f32.mrb[0].mxu0
    %v556 = vadd.f32 %v276, %v555
    %v557 = vpop.f32.mrb[0].mxu0
    %558 = vmatprep.mubr.bf16.mxu0 %v172
    %559 = vmatmul.mubr.bf16.gmra.mrb[0].mxu0 %v171
    %v560 = vpop.f32.mrb[0].mxu0
    %v561 = vadd.f32 %v276, %v560
    %v562 = vpop.f32.mrb[0].mxu0
    %v563 = vpop.f32.mrb[0].mxu0
    %v564 = vadd.f32 %v276, %v563
    %v565 = vpop.f32.mrb[0].mxu0
    %566 = vmatprep.mubr.bf16.mxu0 %v176
    %567 = vmatmul.mubr.bf16.gmra.mrb[0].mxu0 %v175
    %v568 = vpop.f32.mrb[0].mxu0
    %v569 = vadd.f32 %v276, %v568
    %v570 = vpop.f32.mrb[0].mxu0
    %v571 = vpop.f32.mrb[0].mxu0
    %v572 = vadd.f32 %v276, %v571
    %v573 = vpop.f32.mrb[0].mxu0
    %574 = vmatprep.mubr.bf16.mxu0 %v180
    %575 = vmatmul.mubr.bf16.gmra.mrb[0].mxu0 %v179
    %v576 = vpop.f32.mrb[0].mxu0
    %v577 = vadd.f32 %v276, %v576
    %v578 = vpop.f32.mrb[0].mxu0
    %v579 = vpop.f32.mrb[0].mxu0
    %v580 = vadd.f32 %v276, %v579
    %v581 = vpop.f32.mrb[0].mxu0
    %582 = vmatprep.mubr.bf16.mxu0 %v184
    %583 = vmatmul.mubr.bf16.gmra.mrb[0].mxu0 %v183
    %v584 = vpop.f32.mrb[0].mxu0
    %v585 = vadd.f32 %v276, %v584
    %v586 = vpop.f32.mrb[0].mxu0
    %v587 = vpop.f32.mrb[0].mxu0
    %v588 = vadd.f32 %v276, %v587
    %v589 = vpop.f32.mrb[0].mxu0
    %590 = vmatprep.mubr.bf16.mxu0 %v188
    %591 = vmatmul.mubr.bf16.gmra.mrb[0].mxu0 %v187
    %v592 = vpop.f32.mrb[0].mxu0
    %v593 = vadd.f32 %v276, %v592
    %v594 = vpop.f32.mrb[0].mxu0
    %v595 = vpop.f32.mrb[0].mxu0
    %v596 = vadd.f32 %v276, %v595
    %v597 = vpop.f32.mrb[0].mxu0
    %598 = vmatprep.mubr.bf16.mxu0 %v192
    %599 = vmatmul.mubr.bf16.gmra.mrb[0].mxu0 %v191
    %v600 = vpop.f32.mrb[0].mxu0
    %v601 = vadd.f32 %v276, %v600
    %v602 = vpop.f32.mrb[0].mxu0
    %v603 = vpop.f32.mrb[0].mxu0
    %v604 = vadd.f32 %v276, %v603
    %v605 = vpop.f32.mrb[0].mxu0
    %606 = vmatprep.mubr.bf16.mxu0 %v196
    %607 = vmatmul.mubr.bf16.gmra.mrb[0].mxu0 %v195
    %v608 = vpop.f32.mrb[0].mxu0
    %v609 = vadd.f32 %v276, %v608
    %v610 = vpop.f32.mrb[0].mxu0
    %v611 = vpop.f32.mrb[0].mxu0
    %v612 = vadd.f32 %v276, %v611
    %v613 = vpop.f32.mrb[0].mxu0
    %614 = vmatprep.mubr.bf16.mxu0 %v200
    %615 = vmatmul.mubr.bf16.gmra.mrb[0].mxu0 %v199
    %v616 = vpop.f32.mrb[0].mxu0
    %v617 = vadd.f32 %v276, %v616
    %v618 = vpop.f32.mrb[0].mxu0
    %v619 = vpop.f32.mrb[0].mxu0
    %v620 = vadd.f32 %v276, %v619
    %v621 = vpop.f32.mrb[0].mxu0
    %622 = vmatprep.mubr.bf16.mxu0 %v204
    %623 = vmatmul.mubr.bf16.gmra.mrb[0].mxu0 %v203
    %v624 = vpop.f32.mrb[0].mxu0
    %v625 = vadd.f32 %v276, %v624
    %v626 = vpop.f32.mrb[0].mxu0
    %v627 = vpop.f32.mrb[0].mxu0
    %v628 = vadd.f32 %v276, %v627
    %v629 = vpop.f32.mrb[0].mxu0
    %630 = vdwg.mxu0
    %631 = vmatprep.subr.bf16.mxu0 0
    %632 = vmatpush1.bf16.msra.mxu0 %v422
    %633 = vmatprep.subr.bf16.mxu0 0
    %634 = vmatpush1.bf16.msra.mxu0 %v423
    %635 = vmatprep.subr.bf16.mxu0 0
    %636 = vmatpush1.bf16.msra.mxu0 %v424
    %637 = vmatprep.subr.bf16.mxu0 0
    %638 = vmatpush1.bf16.msra.mxu0 %v425
    %639 = vmatprep.subr.bf16.mxu0 0
    %640 = vmatpush1.bf16.msra.mxu0 %v426
    %641 = vmatprep.subr.bf16.mxu0 0
    %642 = vmatpush1.bf16.msra.mxu0 %v427
    %643 = vmatprep.subr.bf16.mxu0 0
    %644 = vmatpush1.bf16.msra.mxu0 %v428
    %645 = vmatprep.subr.bf16.mxu0 0
    %646 = vmatpush1.bf16.msra.mxu0 %v429
    %647 = vmatprep.subr.bf16.mxu0 0
    %648 = vmatpush1.bf16.msra.mxu0 %v430
    %649 = vmatprep.subr.bf16.mxu0 0
    %650 = vmatpush1.bf16.msra.mxu0 %v431
    %651 = vmatprep.subr.bf16.mxu0 0
    %652 = vmatpush1.bf16.msra.mxu0 %v432
    %653 = vmatprep.subr.bf16.mxu0 0
    %654 = vmatpush1.bf16.msra.mxu0 %v433
    %655 = vmatprep.subr.bf16.mxu0 0
    %656 = vmatpush1.bf16.msra.mxu0 %v434
    %657 = vmatprep.subr.bf16.mxu0 0
    %658 = vmatpush1.bf16.msra.mxu0 %v435
    %659 = vmatprep.subr.bf16.mxu0 0
    %660 = vmatpush1.bf16.msra.mxu0 %v436
    %661 = vmatprep.subr.bf16.mxu0 0
    %662 = vmatpush1.bf16.msra.mxu0 %v437
    %663 = vmatprep.mubr.bf16.mxu0 %v146
    %664 = vmatmul.mubr.bf16.gmra.mrb[0].mxu0 %v145
    %v665 = vpop.f32.mrb[0].mxu0
    %v666 = vadd.f32 %v505, %v665
    %v667 = vpop.f32.mrb[0].mxu0
    %v668 = vpop.f32.mrb[0].mxu0
    %v669 = vadd.f32 %v508, %v668
    %v670 = vpop.f32.mrb[0].mxu0
    %671 = vmatprep.mubr.bf16.mxu0 %v150
    %672 = vmatmul.mubr.bf16.gmra.mrb[0].mxu0 %v149
    %v673 = vpop.f32.mrb[0].mxu0
    %v674 = vadd.f32 %v513, %v673
    %v675 = vpop.f32.mrb[0].mxu0
    %v676 = vpop.f32.mrb[0].mxu0
    %v677 = vadd.f32 %v516, %v676
    %v678 = vpop.f32.mrb[0].mxu0
    %679 = vmatprep.mubr.bf16.mxu0 %v154
    %680 = vmatmul.mubr.bf16.gmra.mrb[0].mxu0 %v153
    %v681 = vpop.f32.mrb[0].mxu0
    %v682 = vadd.f32 %v521, %v681
    %v683 = vpop.f32.mrb[0].mxu0
    %v684 = vpop.f32.mrb[0].mxu0
    %v685 = vadd.f32 %v524, %v684
    %v686 = vpop.f32.mrb[0].mxu0
    %687 = vmatprep.mubr.bf16.mxu0 %v158
    %688 = vmatmul.mubr.bf16.gmra.mrb[0].mxu0 %v157
    %v689 = vpop.f32.mrb[0].mxu0
    %v690 = vadd.f32 %v529, %v689
    %v691 = vpop.f32.mrb[0].mxu0
    %v692 = vpop.f32.mrb[0].mxu0
    %v693 = vadd.f32 %v532, %v692
    %v694 = vpop.f32.mrb[0].mxu0
    %695 = vmatprep.mubr.bf16.mxu0 %v162
    %696 = vmatmul.mubr.bf16.gmra.mrb[0].mxu0 %v161
    %v697 = vpop.f32.mrb[0].mxu0
    %v698 = vadd.f32 %v537, %v697
    %v699 = vpop.f32.mrb[0].mxu0
    %v700 = vpop.f32.mrb[0].mxu0
    %v701 = vadd.f32 %v540, %v700
    %v702 = vpop.f32.mrb[0].mxu0
    %703 = vmatprep.mubr.bf16.mxu0 %v166
    %704 = vmatmul.mubr.bf16.gmra.mrb[0].mxu0 %v165
    %v705 = vpop.f32.mrb[0].mxu0
    %v706 = vadd.f32 %v545, %v705
    %v707 = vpop.f32.mrb[0].mxu0
    %v708 = vpop.f32.mrb[0].mxu0
    %v709 = vadd.f32 %v548, %v708
    %v710 = vpop.f32.mrb[0].mxu0
    %711 = vmatprep.mubr.bf16.mxu0 %v170
    %712 = vmatmul.mubr.bf16.gmra.mrb[0].mxu0 %v169
    %v713 = vpop.f32.mrb[0].mxu0
    %v714 = vadd.f32 %v553, %v713
    %v715 = vpop.f32.mrb[0].mxu0
    %v716 = vpop.f32.mrb[0].mxu0
    %v717 = vadd.f32 %v556, %v716
    %v718 = vpop.f32.mrb[0].mxu0
    %719 = vmatprep.mubr.bf16.mxu0 %v174
    %720 = vmatmul.mubr.bf16.gmra.mrb[0].mxu0 %v173
    %v721 = vpop.f32.mrb[0].mxu0
    %v722 = vadd.f32 %v561, %v721
    %v723 = vpop.f32.mrb[0].mxu0
    %v724 = vpop.f32.mrb[0].mxu0
    %v725 = vadd.f32 %v564, %v724
    %v726 = vpop.f32.mrb[0].mxu0
    %727 = vmatprep.mubr.bf16.mxu0 %v178
    %728 = vmatmul.mubr.bf16.gmra.mrb[0].mxu0 %v177
    %v729 = vpop.f32.mrb[0].mxu0
    %v730 = vadd.f32 %v569, %v729
    %v731 = vpop.f32.mrb[0].mxu0
    %v732 = vpop.f32.mrb[0].mxu0
    %v733 = vadd.f32 %v572, %v732
    %v734 = vpop.f32.mrb[0].mxu0
    %735 = vmatprep.mubr.bf16.mxu0 %v182
    %736 = vmatmul.mubr.bf16.gmra.mrb[0].mxu0 %v181
    %v737 = vpop.f32.mrb[0].mxu0
    %v738 = vadd.f32 %v577, %v737
    %v739 = vpop.f32.mrb[0].mxu0
    %v740 = vpop.f32.mrb[0].mxu0
    %v741 = vadd.f32 %v580, %v740
    %v742 = vpop.f32.mrb[0].mxu0
    %743 = vmatprep.mubr.bf16.mxu0 %v186
    %744 = vmatmul.mubr.bf16.gmra.mrb[0].mxu0 %v185
    %v745 = vpop.f32.mrb[0].mxu0
    %v746 = vadd.f32 %v585, %v745
    %v747 = vpop.f32.mrb[0].mxu0
    %v748 = vpop.f32.mrb[0].mxu0
    %v749 = vadd.f32 %v588, %v748
    %v750 = vpop.f32.mrb[0].mxu0
    %751 = vmatprep.mubr.bf16.mxu0 %v190
    %752 = vmatmul.mubr.bf16.gmra.mrb[0].mxu0 %v189
    %v753 = vpop.f32.mrb[0].mxu0
    %v754 = vadd.f32 %v593, %v753
    %v755 = vpop.f32.mrb[0].mxu0
    %v756 = vpop.f32.mrb[0].mxu0
    %v757 = vadd.f32 %v596, %v756
    %v758 = vpop.f32.mrb[0].mxu0
    %759 = vmatprep.mubr.bf16.mxu0 %v194
    %760 = vmatmul.mubr.bf16.gmra.mrb[0].mxu0 %v193
    %v761 = vpop.f32.mrb[0].mxu0
    %v762 = vadd.f32 %v601, %v761
    %v763 = vpop.f32.mrb[0].mxu0
    %v764 = vpop.f32.mrb[0].mxu0
    %v765 = vadd.f32 %v604, %v764
    %v766 = vpop.f32.mrb[0].mxu0
    %767 = vmatprep.mubr.bf16.mxu0 %v198
    %768 = vmatmul.mubr.bf16.gmra.mrb[0].mxu0 %v197
    %v769 = vpop.f32.mrb[0].mxu0
    %v770 = vadd.f32 %v609, %v769
    %v771 = vpop.f32.mrb[0].mxu0
    %v772 = vpop.f32.mrb[0].mxu0
    %v773 = vadd.f32 %v612, %v772
    %v774 = vpop.f32.mrb[0].mxu0
    %775 = vmatprep.mubr.bf16.mxu0 %v202
    %776 = vmatmul.mubr.bf16.gmra.mrb[0].mxu0 %v201
    %v777 = vpop.f32.mrb[0].mxu0
    %v778 = vadd.f32 %v617, %v777
    %v779 = vpop.f32.mrb[0].mxu0
    %v780 = vpop.f32.mrb[0].mxu0
    %v781 = vadd.f32 %v620, %v780
    %v782 = vpop.f32.mrb[0].mxu0
    %783 = vmatprep.mubr.bf16.mxu0 %v206
    %784 = vmatmul.mubr.bf16.gmra.mrb[0].mxu0 %v205
    %v785 = vpop.f32.mrb[0].mxu0
    %v786 = vadd.f32 %v625, %v785
    %v787 = vpop.f32.mrb[0].mxu0
    %v788 = vpop.f32.mrb[0].mxu0
    %v789 = vadd.f32 %v628, %v788
    %v790 = vpop.f32.mrb[0].mxu0
    %791 = vdwg.mxu0
    %792 = vmax.xlane.f32.xlu0 %v666
    %v793 = vpop.xlane.xlu0 %792
    %794 = vmax.xlane.f32.xlu0 %v669
    %v795 = vpop.xlane.xlu0 %794
    %796 = vmax.xlane.f32.xlu0 %v674
    %v797 = vpop.xlane.xlu0 %796
    %798 = vmax.xlane.f32.xlu0 %v677
    %v799 = vpop.xlane.xlu0 %798
    %800 = vmax.xlane.f32.xlu0 %v682
    %v801 = vpop.xlane.xlu0 %800
    %802 = vmax.xlane.f32.xlu0 %v685
    %v803 = vpop.xlane.xlu0 %802
    %804 = vmax.xlane.f32.xlu0 %v690
    %v805 = vpop.xlane.xlu0 %804
    %806 = vmax.xlane.f32.xlu0 %v693
    %v807 = vpop.xlane.xlu0 %806
    %808 = vmax.xlane.f32.xlu0 %v698
    %v809 = vpop.xlane.xlu0 %808
    %810 = vmax.xlane.f32.xlu0 %v701
    %v811 = vpop.xlane.xlu0 %810
    %812 = vmax.xlane.f32.xlu0 %v706
    %v813 = vpop.xlane.xlu0 %812
    %814 = vmax.xlane.f32.xlu0 %v709
    %v815 = vpop.xlane.xlu0 %814
    %816 = vmax.xlane.f32.xlu0 %v714
    %v817 = vpop.xlane.xlu0 %816
    %818 = vmax.xlane.f32.xlu0 %v717
    %v819 = vpop.xlane.xlu0 %818
    %820 = vmax.xlane.f32.xlu0 %v722
    %v821 = vpop.xlane.xlu0 %820
    %822 = vmax.xlane.f32.xlu0 %v725
    %v823 = vpop.xlane.xlu0 %822
    %824 = vmax.xlane.f32.xlu0 %v730
    %v825 = vpop.xlane.xlu0 %824
    %826 = vmax.xlane.f32.xlu0 %v733
    %v827 = vpop.xlane.xlu0 %826
    %828 = vmax.xlane.f32.xlu0 %v738
    %v829 = vpop.xlane.xlu0 %828
    %830 = vmax.xlane.f32.xlu0 %v741
    %v831 = vpop.xlane.xlu0 %830
    %832 = vmax.xlane.f32.xlu0 %v746
    %v833 = vpop.xlane.xlu0 %832
    %834 = vmax.xlane.f32.xlu0 %v749
    %v835 = vpop.xlane.xlu0 %834
    %836 = vmax.xlane.f32.xlu0 %v754
    %v837 = vpop.xlane.xlu0 %836
    %838 = vmax.xlane.f32.xlu0 %v757
    %v839 = vpop.xlane.xlu0 %838
    %840 = vmax.xlane.f32.xlu0 %v762
    %v841 = vpop.xlane.xlu0 %840
    %842 = vmax.xlane.f32.xlu0 %v765
    %v843 = vpop.xlane.xlu0 %842
    %844 = vmax.xlane.f32.xlu0 %v770
    %v845 = vpop.xlane.xlu0 %844
    %846 = vmax.xlane.f32.xlu0 %v773
    %v847 = vpop.xlane.xlu0 %846
    %848 = vmax.xlane.f32.xlu0 %v778
    %v849 = vpop.xlane.xlu0 %848
    %850 = vmax.xlane.f32.xlu0 %v781
    %v851 = vpop.xlane.xlu0 %850
    %852 = vmax.xlane.f32.xlu0 %v786
    %v853 = vpop.xlane.xlu0 %852
    %854 = vmax.xlane.f32.xlu0 %v789
    %v855 = vpop.xlane.xlu0 %854
    %v856 = vsub.f32 %v666, %v793
    %v857 = vsub.f32 %v669, %v795
    %v858 = vsub.f32 %v674, %v797
    %v859 = vsub.f32 %v677, %v799
    %v860 = vsub.f32 %v682, %v801
    %v861 = vsub.f32 %v685, %v803
    %v862 = vsub.f32 %v690, %v805
    %v863 = vsub.f32 %v693, %v807
    %v864 = vsub.f32 %v698, %v809
    %v865 = vsub.f32 %v701, %v811
    %v866 = vsub.f32 %v706, %v813
    %v867 = vsub.f32 %v709, %v815
    %v868 = vsub.f32 %v714, %v817
    %v869 = vsub.f32 %v717, %v819
    %v870 = vsub.f32 %v722, %v821
    %v871 = vsub.f32 %v725, %v823
    %v872 = vsub.f32 %v730, %v825
    %v873 = vsub.f32 %v733, %v827
    %v874 = vsub.f32 %v738, %v829
    %v875 = vsub.f32 %v741, %v831
    %v876 = vsub.f32 %v746, %v833
    %v877 = vsub.f32 %v749, %v835
    %v878 = vsub.f32 %v754, %v837
    %v879 = vsub.f32 %v757, %v839
    %v880 = vsub.f32 %v762, %v841
    %v881 = vsub.f32 %v765, %v843
    %v882 = vsub.f32 %v770, %v845
    %v883 = vsub.f32 %v773, %v847
    %v884 = vsub.f32 %v778, %v849
    %v885 = vsub.f32 %v781, %v851
    %v886 = vsub.f32 %v786, %v853
    %v887 = vsub.f32 %v789, %v855
    %v888 = vmul.f32 %v856, 1.442695
    %v889 = vpow.pop %v888
    %v890 = vmul.f32 %v857, 1.442695
    %v891 = vpow.pop %v890
    %v892 = vmul.f32 %v858, 1.442695
    %v893 = vpow.pop %v892
    %v894 = vmul.f32 %v859, 1.442695
    %v895 = vpow.pop %v894
    %v896 = vmul.f32 %v860, 1.442695
    %v897 = vpow.pop %v896
    %v898 = vmul.f32 %v861, 1.442695
    %v899 = vpow.pop %v898
    %v900 = vmul.f32 %v862, 1.442695
    %v901 = vpow.pop %v900
    %v902 = vmul.f32 %v863, 1.442695
    %v903 = vpow.pop %v902
    %v904 = vmul.f32 %v864, 1.442695
    %v905 = vpow.pop %v904
    %v906 = vmul.f32 %v865, 1.442695
    %v907 = vpow.pop %v906
    %v908 = vmul.f32 %v866, 1.442695
    %v909 = vpow.pop %v908
    %v910 = vmul.f32 %v867, 1.442695
    %v911 = vpow.pop %v910
    %v912 = vmul.f32 %v868, 1.442695
    %v913 = vpow.pop %v912
    %v914 = vmul.f32 %v869, 1.442695
    %v915 = vpow.pop %v914
    %v916 = vmul.f32 %v870, 1.442695
    %v917 = vpow.pop %v916
    %v918 = vmul.f32 %v871, 1.442695
    %v919 = vpow.pop %v918
    %v920 = vmul.f32 %v872, 1.442695
    %v921 = vpow.pop %v920
    %v922 = vmul.f32 %v873, 1.442695
    %v923 = vpow.pop %v922
    %v924 = vmul.f32 %v874, 1.442695
    %v925 = vpow.pop %v924
    %v926 = vmul.f32 %v875, 1.442695
    %v927 = vpow.pop %v926
    %v928 = vmul.f32 %v876, 1.442695
    %v929 = vpow.pop %v928
    %v930 = vmul.f32 %v877, 1.442695
    %v931 = vpow.pop %v930
    %v932 = vmul.f32 %v878, 1.442695
    %v933 = vpow.pop %v932
    %v934 = vmul.f32 %v879, 1.442695
    %v935 = vpow.pop %v934
    %v936 = vmul.f32 %v880, 1.442695
    %v937 = vpow.pop %v936
    %v938 = vmul.f32 %v881, 1.442695
    %v939 = vpow.pop %v938
    %v940 = vmul.f32 %v882, 1.442695
    %v941 = vpow.pop %v940
    %v942 = vmul.f32 %v883, 1.442695
    %v943 = vpow.pop %v942
    %v944 = vmul.f32 %v884, 1.442695
    %v945 = vpow.pop %v944
    %v946 = vmul.f32 %v885, 1.442695
    %v947 = vpow.pop %v946
    %v948 = vmul.f32 %v886, 1.442695
    %v949 = vpow.pop %v948
    %v950 = vmul.f32 %v887, 1.442695
    %v951 = vpow.pop %v950
    %952 = vadd.xlane.f32.xlu0 %v889
    %v953 = vpop.xlane.xlu0 %952
    %954 = vadd.xlane.f32.xlu0 %v891
    %v955 = vpop.xlane.xlu0 %954
    %956 = vadd.xlane.f32.xlu0 %v893
    %v957 = vpop.xlane.xlu0 %956
    %958 = vadd.xlane.f32.xlu0 %v895
    %v959 = vpop.xlane.xlu0 %958
    %960 = vadd.xlane.f32.xlu0 %v897
    %v961 = vpop.xlane.xlu0 %960
    %962 = vadd.xlane.f32.xlu0 %v899
    %v963 = vpop.xlane.xlu0 %962
    %964 = vadd.xlane.f32.xlu0 %v901
    %v965 = vpop.xlane.xlu0 %964
    %966 = vadd.xlane.f32.xlu0 %v903
    %v967 = vpop.xlane.xlu0 %966
    %968 = vadd.xlane.f32.xlu0 %v905
    %v969 = vpop.xlane.xlu0 %968
    %970 = vadd.xlane.f32.xlu0 %v907
    %v971 = vpop.xlane.xlu0 %970
    %972 = vadd.xlane.f32.xlu0 %v909
    %v973 = vpop.xlane.xlu0 %972
    %974 = vadd.xlane.f32.xlu0 %v911
    %v975 = vpop.xlane.xlu0 %974
    %976 = vadd.xlane.f32.xlu0 %v913
    %v977 = vpop.xlane.xlu0 %976
    %978 = vadd.xlane.f32.xlu0 %v915
    %v979 = vpop.xlane.xlu0 %978
    %980 = vadd.xlane.f32.xlu0 %v917
    %v981 = vpop.xlane.xlu0 %980
    %982 = vadd.xlane.f32.xlu0 %v919
    %v983 = vpop.xlane.xlu0 %982
    %984 = vadd.xlane.f32.xlu0 %v921
    %v985 = vpop.xlane.xlu0 %984
    %986 = vadd.xlane.f32.xlu0 %v923
    %v987 = vpop.xlane.xlu0 %986
    %988 = vadd.xlane.f32.xlu0 %v925
    %v989 = vpop.xlane.xlu0 %988
    %990 = vadd.xlane.f32.xlu0 %v927
    %v991 = vpop.xlane.xlu0 %990
    %992 = vadd.xlane.f32.xlu0 %v929
    %v993 = vpop.xlane.xlu0 %992
    %994 = vadd.xlane.f32.xlu0 %v931
    %v995 = vpop.xlane.xlu0 %994
    %996 = vadd.xlane.f32.xlu0 %v933
    %v997 = vpop.xlane.xlu0 %996
    %998 = vadd.xlane.f32.xlu0 %v935
    %v999 = vpop.xlane.xlu0 %998
    %1000 = vadd.xlane.f32.xlu0 %v937
    %v1001 = vpop.xlane.xlu0 %1000
    %1002 = vadd.xlane.f32.xlu0 %v939
    %v1003 = vpop.xlane.xlu0 %1002
    %1004 = vadd.xlane.f32.xlu0 %v941
    %v1005 = vpop.xlane.xlu0 %1004
    %1006 = vadd.xlane.f32.xlu0 %v943
    %v1007 = vpop.xlane.xlu0 %1006
    %1008 = vadd.xlane.f32.xlu0 %v945
    %v1009 = vpop.xlane.xlu0 %1008
    %1010 = vadd.xlane.f32.xlu0 %v947
    %v1011 = vpop.xlane.xlu0 %1010
    %1012 = vadd.xlane.f32.xlu0 %v949
    %v1013 = vpop.xlane.xlu0 %1012
    %1014 = vadd.xlane.f32.xlu0 %v951
    %v1015 = vpop.xlane.xlu0 %1014
    %v1016 = vrcp.pop %v953
    %v1017 = vmul.f32 %v889, %v1016
    %v1018 = vrcp.pop %v955
    %v1019 = vmul.f32 %v891, %v1018
    %v1020 = vrcp.pop %v957
    %v1021 = vmul.f32 %v893, %v1020
    %v1022 = vrcp.pop %v959
    %v1023 = vmul.f32 %v895, %v1022
    %v1024 = vrcp.pop %v961
    %v1025 = vmul.f32 %v897, %v1024
    %v1026 = vrcp.pop %v963
    %v1027 = vmul.f32 %v899, %v1026
    %v1028 = vrcp.pop %v965
    %v1029 = vmul.f32 %v901, %v1028
    %v1030 = vrcp.pop %v967
    %v1031 = vmul.f32 %v903, %v1030
    %v1032 = vrcp.pop %v969
    %v1033 = vmul.f32 %v905, %v1032
    %v1034 = vrcp.pop %v971
    %v1035 = vmul.f32 %v907, %v1034
    %v1036 = vrcp.pop %v973
    %v1037 = vmul.f32 %v909, %v1036
    %v1038 = vrcp.pop %v975
    %v1039 = vmul.f32 %v911, %v1038
    %v1040 = vrcp.pop %v977
    %v1041 = vmul.f32 %v913, %v1040
    %v1042 = vrcp.pop %v979
    %v1043 = vmul.f32 %v915, %v1042
    %v1044 = vrcp.pop %v981
    %v1045 = vmul.f32 %v917, %v1044
    %v1046 = vrcp.pop %v983
    %v1047 = vmul.f32 %v919, %v1046
    %v1048 = vrcp.pop %v985
    %v1049 = vmul.f32 %v921, %v1048
    %v1050 = vrcp.pop %v987
    %v1051 = vmul.f32 %v923, %v1050
    %v1052 = vrcp.pop %v989
    %v1053 = vmul.f32 %v925, %v1052
    %v1054 = vrcp.pop %v991
    %v1055 = vmul.f32 %v927, %v1054
    %v1056 = vrcp.pop %v993
    %v1057 = vmul.f32 %v929, %v1056
    %v1058 = vrcp.pop %v995
    %v1059 = vmul.f32 %v931, %v1058
    %v1060 = vrcp.pop %v997
    %v1061 = vmul.f32 %v933, %v1060
    %v1062 = vrcp.pop %v999
    %v1063 = vmul.f32 %v935, %v1062
    %v1064 = vrcp.pop %v1001
    %v1065 = vmul.f32 %v937, %v1064
    %v1066 = vrcp.pop %v1003
    %v1067 = vmul.f32 %v939, %v1066
    %v1068 = vrcp.pop %v1005
    %v1069 = vmul.f32 %v941, %v1068
    %v1070 = vrcp.pop %v1007
    %v1071 = vmul.f32 %v943, %v1070
    %v1072 = vrcp.pop %v1009
    %v1073 = vmul.f32 %v945, %v1072
    %v1074 = vrcp.pop %v1011
    %v1075 = vmul.f32 %v947, %v1074
    %v1076 = vrcp.pop %v1013
    %v1077 = vmul.f32 %v949, %v1076
    %v1078 = vrcp.pop %v1015
    %v1079 = vmul.f32 %v951, %v1078
    %vm1080 = vcmask 64512
    %1081 = vst.msk [vmem:[#allocation2] sm:$0xff] %vm1080, %v1017
    %1082 = vst.msk [vmem:[#allocation2 + $0x8] sm:$0xff] %vm1080, %v1019
    %1083 = vst.msk [vmem:[#allocation2 + $0x10] sm:$0xff] %vm1080, %v1021
    %1084 = vst.msk [vmem:[#allocation2 + $0x18] sm:$0xff] %vm1080, %v1023
    %1085 = vst.msk [vmem:[#allocation2 + $0x20] sm:$0xff] %vm1080, %v1025
    %1086 = vst.msk [vmem:[#allocation2 + $0x28] sm:$0xff] %vm1080, %v1027
    %1087 = vst.msk [vmem:[#allocation2 + $0x30] sm:$0xff] %vm1080, %v1029
    %1088 = vst.msk [vmem:[#allocation2 + $0x38] sm:$0xff] %vm1080, %v1031
    %1089 = vst.msk [vmem:[#allocation2 + $0x40] sm:$0xff] %vm1080, %v1033
    %1090 = vst.msk [vmem:[#allocation2 + $0x48] sm:$0xff] %vm1080, %v1035
    %1091 = vst.msk [vmem:[#allocation2 + $0x50] sm:$0xff] %vm1080, %v1037
    %1092 = vst.msk [vmem:[#allocation2 + $0x58] sm:$0xff] %vm1080, %v1039
    %1093 = vst.msk [vmem:[#allocation2 + $0x60] sm:$0xff] %vm1080, %v1041
    %1094 = vst.msk [vmem:[#allocation2 + $0x68] sm:$0xff] %vm1080, %v1043
    %1095 = vst.msk [vmem:[#allocation2 + $0x70] sm:$0xff] %vm1080, %v1045
    %1096 = vst.msk [vmem:[#allocation2 + $0x78] sm:$0xff] %vm1080, %v1047
    %1097 = vst.msk [vmem:[#allocation2 + $0x80] sm:$0xff] %vm1080, %v1049
    %1098 = vst.msk [vmem:[#allocation2 + $0x88] sm:$0xff] %vm1080, %v1051
    %1099 = vst.msk [vmem:[#allocation2 + $0x90] sm:$0xff] %vm1080, %v1053
    %1100 = vst.msk [vmem:[#allocation2 + $0x98] sm:$0xff] %vm1080, %v1055
    %1101 = vst.msk [vmem:[#allocation2 + $0xa0] sm:$0xff] %vm1080, %v1057
    %1102 = vst.msk [vmem:[#allocation2 + $0xa8] sm:$0xff] %vm1080, %v1059
    %1103 = vst.msk [vmem:[#allocation2 + $0xb0] sm:$0xff] %vm1080, %v1061
    %1104 = vst.msk [vmem:[#allocation2 + $0xb8] sm:$0xff] %vm1080, %v1063
    %1105 = vst.msk [vmem:[#allocation2 + $0xc0] sm:$0xff] %vm1080, %v1065
    %1106 = vst.msk [vmem:[#allocation2 + $0xc8] sm:$0xff] %vm1080, %v1067
    %1107 = vst.msk [vmem:[#allocation2 + $0xd0] sm:$0xff] %vm1080, %v1069
    %1108 = vst.msk [vmem:[#allocation2 + $0xd8] sm:$0xff] %vm1080, %v1071
    %1109 = vst.msk [vmem:[#allocation2 + $0xe0] sm:$0xff] %vm1080, %v1073
    %1110 = vst.msk [vmem:[#allocation2 + $0xe8] sm:$0xff] %vm1080, %v1075
    %1111 = vst.msk [vmem:[#allocation2 + $0xf0] sm:$0xff] %vm1080, %v1077
    %1112 = vst.msk [vmem:[#allocation2 + $0xf8] sm:$0xff] %vm1080, %v1079
    // Predicated region
    $region14: #{net_forward.1} parent=1 // pred_check
      _
    $region15: #{net_forward.1} parent=1 // pred_check_branch
      %1114 = sbr.rel (0) target = $region17
    $region16: #{net_forward.1} parent=1 // pred_region
      // Predicated region
      $region18: #{net_forward.1} parent=16 // pred_check
        _
      $region19: #{net_forward.1} parent=16 // pred_check_branch
        %1116 = sbr.rel (0) target = $region21
      $region20: #{net_forward.1} parent=16 // pred_region
        // Predicated region
        $region22: #{net_forward.1} parent=20 // pred_check
          _
        $region23: #{net_forward.1} parent=20 // pred_check_branch
          %1118 = sbr.rel (0) target = $region25
        $region24: #{net_forward.1} parent=20 // pred_region
          // Predicated region
          $region37: #{net_forward.1} parent=24 // pred_check
            _
          $region38: #{net_forward.1} parent=24 // pred_check_branch
            %1133 = sbr.rel (0) target = $region40
          $region39: #{net_forward.1} parent=24 // pred_region
            loop: start=0, step=1, limit=1
            $region41: #{net_forward.1} parent=39 // loop_pre_header
              _
            $region42: #{net_forward.1} parent=39 // loop_header
              %s1135 = sphi 0, %s1139
              %p1136 = scmp.ge.s32.totalorder %s1135, 1
              %s1140 = sphi [#allocation2], [#allocation2]
              %s1141 = sphi %s3, %s3
            $region43: #{net_forward.1} parent=39 // loop_header_branch
              %1138 = sbr.rel (%p1136) target = $region47
            $region44: #{net_forward.1} parent=39 // loop_body
              %v1142 = vld [vmem:[%s1140] sm:$0xff]
              %1143 = vst [vmem:[%s1141] sm:$0xff] %v1142
            $region45: #{net_forward.1} parent=39 // loop_footer
              %s1139 = sadd.s32 1, %s1135
            $region46: #{net_forward.1} parent=39 // loop_footer_branch
              %1134 = sbr.rel target = $region42
            $region47: #{net_forward.1} parent=39 // loop_exit
              _
          $region40: #{net_forward.1} parent=24 // pred_fallthru
            _
          // Predicated region
          $region48: #{net_forward.1} parent=24 // pred_check
            _
          $region49: #{net_forward.1} parent=24 // pred_check_branch
            %1145 = sbr.rel target = $region51
          $region50: #{net_forward.1} parent=24 // pred_region
            _
          $region51: #{net_forward.1} parent=24 // pred_fallthru
            _
        $region25: #{net_forward.1} parent=20 // pred_fallthru
          _
        // Predicated region
        $region26: #{net_forward.1} parent=20 // pred_check
          _
        $region27: #{net_forward.1} parent=20 // pred_check_branch
          %1120 = sbr.rel target = $region29
        $region28: #{net_forward.1} parent=20 // pred_region
          loop: start=0, step=1, limit=1
          $region30: #{net_forward.1} parent=28 // loop_pre_header
            _
          $region31: #{net_forward.1} parent=28 // loop_header
            %s1123 = sphi 0, %s1127
            %p1124 = scmp.ge.s32.totalorder %s1123, 1
            %s1128 = sphi [#allocation2], [#allocation2]
            %s1129 = sphi %s3, %s3
          $region32: #{net_forward.1} parent=28 // loop_header_branch
            %1126 = sbr.rel (%p1124) target = $region36
          $region33: #{net_forward.1} parent=28 // loop_body
            %v1130 = vld [vmem:[%s1128] sm:$0xff]
            %1131 = vst [vmem:[%s1129] sm:$0xff] %v1130
          $region34: #{net_forward.1} parent=28 // loop_footer
            %s1127 = sadd.s32 1, %s1123
          $region35: #{net_forward.1} parent=28 // loop_footer_branch
            %1122 = sbr.rel target = $region31
          $region36: #{net_forward.1} parent=28 // loop_exit
            _
        $region29: #{net_forward.1} parent=20 // pred_fallthru
          _
      $region21: #{net_forward.1} parent=16 // pred_fallthru
        _
      %1146 = vnop
    $region17: #{net_forward.1} parent=1 // pred_fallthru
      _
    // Predicated region
    $region52: #{net_forward.1} parent=1 // pred_check
      _
    $region53: #{net_forward.1} parent=1 // pred_check_branch
      %1148 = sbr.rel (0) target = $region55
    $region54: #{net_forward.1} parent=1 // pred_region
      _
    $region55: #{net_forward.1} parent=1 // pred_fallthru
      _

</llo_original>
